<compile_context>
chip_gen: v6e
topology: v6e:2x2x1
jax: 0.10.0
libtpu: 0.0.40
codegen_flags: <defaults>
</compile_context>

<pallas_src>
import jax
import jax.numpy as jnp
from jax.experimental import pallas as pl
from jax.experimental.pallas import tpu as pltpu

EPS = 0.0  # GINConv default epsilon


def _round_up(v, m):
    return ((v + m - 1) // m) * m


def gin_kernel(a_ref, x_ref, w1_ref, b1_ref, w2_ref, b2_ref, o_ref, acc_ref):
    """Fused GIN layer for one row block; K axis tiles the A @ X reduction."""
    k = pl.program_id(1)

    @pl.when(k == 0)
    def _():
        acc_ref[...] = jnp.zeros_like(acc_ref)

    # Tiled neighborhood aggregation on the MXU (bf16 operands, f32 acc).
    # The (1+eps) self term is already folded into A's diagonal.
    acc_ref[...] += jnp.dot(a_ref[...], x_ref[...],
                            preferred_element_type=jnp.float32)

    @pl.when(k == pl.num_programs(1) - 1)
    def _():
        # MLP: Linear -> ReLU -> Linear.  Matmuls in bf16 on the MXU;
        # bias add / ReLU kept in f32 (v5e VPU has no bf16 VALU).
        h = jnp.dot(acc_ref[...].astype(jnp.bfloat16), w1_ref[...],
                    preferred_element_type=jnp.float32) + b1_ref[...]
        h = jnp.maximum(h, 0.0)
        out = jnp.dot(h.astype(jnp.bfloat16), w2_ref[...],
                      preferred_element_type=jnp.float32) + b2_ref[...]
        o_ref[...] = out.astype(o_ref.dtype)


def gin_forward(x, edge_index, w1, b1, w2, b2, *, tile=256):
    """x: [N, F_in] f32, edge_index: [2, E] int32 (row 0 = src, row 1 = dst).

    tile: row / K tile size for the aggregation matmul; 256 matches the
    v6e/v7x MXU (2x256^2).  Small graphs automatically drop to 128.
    """
    n, f_in = x.shape
    hid = w1.shape[1]
    out_dim = w2.shape[1]

    # ---- plain-JAX glue: dense adjacency with the (1+eps) self-term folded in.
    # TODO(synk): for large sparse graphs replace dense A @ X with a CSR /
    # scalar-prefetch gather + segment-sum path; dense aggregation is O(N^2).
    src, dst = edge_index[0], edge_index[1]
    a = jnp.zeros((n, n), jnp.float32).at[dst, src].add(1.0)
    diag = jnp.arange(n)
    a = a.at[diag, diag].add(1.0 + EPS)

    # ---- tiling & padding.
    # Lane-dim tile (tk) must be a multiple of 128; keep tm == tk so one padded
    # size divides both grid axes.  Feature / hidden / output dims padded to
    # 128 lanes (lane-dense stores).
    tm = tk = min(tile, _round_up(n, 128))
    n_pad = _round_up(n, tk)
    f_pad = _round_up(f_in, 128)
    h_pad = _round_up(hid, 128)
    o_pad = _round_up(out_dim, 128)

    # A holds small integer counts (+1 on the diagonal) -> exact in bf16.
    a_p = jnp.zeros((n_pad, n_pad), jnp.bfloat16).at[:n, :n].set(
        a.astype(jnp.bfloat16))
    x_p = jnp.zeros((n_pad, f_pad), jnp.bfloat16).at[:n, :f_in].set(
        x.astype(jnp.bfloat16))
    w1_p = jnp.zeros((f_pad, h_pad), jnp.bfloat16).at[:f_in, :hid].set(
        w1.astype(jnp.bfloat16))
    b1_p = jnp.zeros((1, h_pad), jnp.float32).at[:, :hid].set(
        b1.reshape(1, -1).astype(jnp.float32))
    w2_p = jnp.zeros((h_pad, o_pad), jnp.bfloat16).at[:hid, :out_dim].set(
        w2.astype(jnp.bfloat16))
    b2_p = jnp.zeros((1, o_pad), jnp.float32).at[:, :out_dim].set(
        b2.reshape(1, -1).astype(jnp.float32))

    grid = (n_pad // tm, n_pad // tk)

    out_p = pl.pallas_call(
        gin_kernel,
        out_shape=jax.ShapeDtypeStruct((n_pad, o_pad), jnp.float32),
        grid_spec=pltpu.PrefetchScalarGridSpec(
            num_scalar_prefetch=0,
            grid=grid,
            in_specs=[
                pl.BlockSpec((tm, tk), lambda i, k: (i, k)),        # A tile
                pl.BlockSpec((tk, f_pad), lambda i, k: (k, 0)),     # X row slab
                pl.BlockSpec((f_pad, h_pad), lambda i, k: (0, 0)),  # W1 (resident)
                pl.BlockSpec((1, h_pad), lambda i, k: (0, 0)),      # b1 (resident)
                pl.BlockSpec((h_pad, o_pad), lambda i, k: (0, 0)),  # W2 (resident)
                pl.BlockSpec((1, o_pad), lambda i, k: (0, 0)),      # b2 (resident)
            ],
            out_specs=pl.BlockSpec((tm, o_pad), lambda i, k: (i, 0)),
            scratch_shapes=[pltpu.VMEM((tm, f_pad), jnp.float32)],  # A@X accumulator
        ),
        compiler_params=pltpu.CompilerParams(
            dimension_semantics=("parallel", "arbitrary"),
            vmem_limit_bytes=64 * 1024 * 1024,
        ),
    )(a_p, x_p, w1_p, b1_p, w2_p, b2_p)

    # Strip the row / lane padding.
    return out_p[:n, :out_dim]


def reference_forward(x, edge_index, w1, b1, w2, b2):
    n = x.shape[0]
    src, dst = edge_index[0], edge_index[1]
    a = jnp.zeros((n, n), jnp.float32).at[dst, src].add(1.0)
    h = (1.0 + EPS) * x + a @ x
    h = jnp.maximum(h @ w1 + b1, 0.0)
    return h @ w2 + b2


if __name__ == "__main__":
    # Small shapes consistent with the module: N nodes, input_dim -> hidden -> output_dim
    N, INPUT_DIM, HIDDEN_DIM, OUTPUT_DIM = 16, 32, 64, 8

    key = jax.random.PRNGKey(0)
    kx, k1, k2, kb1, kb2 = jax.random.split(key, 5)

    x = jax.random.normal(kx, (N, INPUT_DIM), dtype=jnp.float32)

    # Deterministic parameter init (synthetic; no checkpoint load).
    w1 = jax.random.normal(k1, (INPUT_DIM, HIDDEN_DIM), dtype=jnp.float32) * 0.1
    b1 = jax.random.normal(kb1, (1, HIDDEN_DIM), dtype=jnp.float32) * 0.01
    w2 = jax.random.normal(k2, (HIDDEN_DIM, OUTPUT_DIM), dtype=jnp.float32) * 0.1
    b2 = jax.random.normal(kb2, (1, OUTPUT_DIM), dtype=jnp.float32) * 0.01

    # Deterministic graph: a bidirectional ring over N nodes.
    idx = jnp.arange(N, dtype=jnp.int32)
    src = jnp.concatenate([idx, (idx + 1) % N])
    dst = jnp.concatenate([(idx + 1) % N, idx])
    edge_index = jnp.stack([src, dst], axis=0)  # [2, E], E = 2N

    out = gin_forward(x, edge_index, w1, b1, w2, b2)
    out = jax.block_until_ready(out)

    ref = reference_forward(x, edge_index, w1, b1, w2, b2)
    assert out.shape == (N, OUTPUT_DIM)
    # bf16 MXU operands -> loosened tolerance vs the f32 reference.
    assert jnp.allclose(out, ref, atol=5e-2, rtol=5e-2)

    print("KERNEL_OK")
</pallas_src>

<mosaic_0001>
module attributes {stable_mosaic.version = 11 : i64} {
  func.func @gin_kernel(%arg0: i32, %arg1: i32, %arg2: memref<128x128xbf16, #tpu.memory_space<vmem>>, %arg3: memref<128x128xbf16, #tpu.memory_space<vmem>>, %arg4: memref<128x128xbf16, #tpu.memory_space<vmem>>, %arg5: memref<1x128xf32, #tpu.memory_space<vmem>>, %arg6: memref<128x128xbf16, #tpu.memory_space<vmem>>, %arg7: memref<1x128xf32, #tpu.memory_space<vmem>>, %arg8: memref<128x128xf32, #tpu.memory_space<vmem>>, %arg9: memref<128x128xf32, #tpu.memory_space<vmem>>) attributes {dimension_semantics = [#tpu.dimension_semantics<parallel>, #tpu.dimension_semantics<arbitrary>], iteration_bounds = array<i64: 1, 1>, scalar_prefetch = 0 : i64, scratch_operands = 1 : i64, tpu.core_type = #tpu.core_type<tc>, window_params = [{transform_indices = @transform_0, window_bounds = array<i64: 128, 128>}, {transform_indices = @transform_1, window_bounds = array<i64: 128, 128>}, {pipeline_mode = #tpu.pipeline_mode<synchronous>, transform_indices = @transform_2, window_bounds = array<i64: 128, 128>}, {pipeline_mode = #tpu.pipeline_mode<synchronous>, transform_indices = @transform_3, window_bounds = array<i64: 1, 128>}, {pipeline_mode = #tpu.pipeline_mode<synchronous>, transform_indices = @transform_4, window_bounds = array<i64: 128, 128>}, {pipeline_mode = #tpu.pipeline_mode<synchronous>, transform_indices = @transform_5, window_bounds = array<i64: 1, 128>}, {transform_indices = @transform_6, window_bounds = array<i64: 128, 128>}]} {
    %c0_i32 = arith.constant 0 : i32
    %0 = arith.cmpi eq, %arg1, %c0_i32 : i32
    %1 = arith.extui %0 : i1 to i32
    %c0_i32_0 = arith.constant 0 : i32
    %2 = arith.cmpi ne, %1, %c0_i32_0 : i32
    scf.if %2 {
      %cst_10 = arith.constant 0.000000e+00 : f32
      %12 = vector.broadcast %cst_10 : f32 to vector<128x128xf32>
      %c0_11 = arith.constant 0 : index
      %c0_12 = arith.constant 0 : index
      %13 = vector.load %arg9[%c0_11, %c0_12] : memref<128x128xf32, #tpu.memory_space<vmem>>, vector<128x128xf32>
      tpu.vector_store %arg9[%c0_11, %c0_12], %12 {strides = array<i32>} : memref<128x128xf32, #tpu.memory_space<vmem>>, vector<128x128xf32>,
    } else {
    }
    %c0 = arith.constant 0 : index
    %c0_1 = arith.constant 0 : index
    %3 = vector.load %arg9[%c0, %c0_1] : memref<128x128xf32, #tpu.memory_space<vmem>>, vector<128x128xf32>
    %c0_2 = arith.constant 0 : index
    %c0_3 = arith.constant 0 : index
    %4 = vector.load %arg2[%c0_2, %c0_3] : memref<128x128xbf16, #tpu.memory_space<vmem>>, vector<128x128xbf16>
    %c0_4 = arith.constant 0 : index
    %c0_5 = arith.constant 0 : index
    %5 = vector.load %arg3[%c0_4, %c0_5] : memref<128x128xbf16, #tpu.memory_space<vmem>>, vector<128x128xbf16>
    %cst = arith.constant dense<0.000000e+00> : vector<128x128xf32>
    %6 = tpu.matmul %4, %5, %cst {dimension_numbers = #tpu.dot_dimension_numbers<[1], [0], [0], [1], [0, 0, 1, 1], [], []>} : vector<128x128xbf16>, vector<128x128xbf16>, vector<128x128xf32> -> vector<128x128xf32>
    %7 = arith.addf %3, %6 : vector<128x128xf32>
    %c0_6 = arith.constant 0 : index
    %c0_7 = arith.constant 0 : index
    %8 = vector.load %arg9[%c0_6, %c0_7] : memref<128x128xf32, #tpu.memory_space<vmem>>, vector<128x128xf32>
    tpu.vector_store %arg9[%c0_6, %c0_7], %7 {strides = array<i32>} : memref<128x128xf32, #tpu.memory_space<vmem>>, vector<128x128xf32>,
    %c0_i32_8 = arith.constant 0 : i32
    %9 = arith.cmpi eq, %arg1, %c0_i32_8 : i32
    %10 = arith.extui %9 : i1 to i32
    %c0_i32_9 = arith.constant 0 : i32
    %11 = arith.cmpi ne, %10, %c0_i32_9 : i32
    scf.if %11 {
      %c0_10 = arith.constant 0 : index
      %c0_11 = arith.constant 0 : index
      %12 = vector.load %arg9[%c0_10, %c0_11] : memref<128x128xf32, #tpu.memory_space<vmem>>, vector<128x128xf32>
      %13 = arith.truncf %12 : vector<128x128xf32> to vector<128x128xbf16>
      %c0_12 = arith.constant 0 : index
      %c0_13 = arith.constant 0 : index
      %14 = vector.load %arg4[%c0_12, %c0_13] : memref<128x128xbf16, #tpu.memory_space<vmem>>, vector<128x128xbf16>
      %cst_14 = arith.constant dense<0.000000e+00> : vector<128x128xf32>
      %15 = tpu.matmul %13, %14, %cst_14 {dimension_numbers = #tpu.dot_dimension_numbers<[1], [0], [0], [1], [0, 0, 1, 1], [], []>} : vector<128x128xbf16>, vector<128x128xbf16>, vector<128x128xf32> -> vector<128x128xf32>
      %c0_15 = arith.constant 0 : index
      %c0_16 = arith.constant 0 : index
      %16 = vector.load %arg5[%c0_15, %c0_16] : memref<1x128xf32, #tpu.memory_space<vmem>>, vector<1x128xf32>
      %17 = vector.broadcast %16 : vector<1x128xf32> to vector<128x128xf32>
      %18 = arith.addf %15, %17 : vector<128x128xf32>
      %cst_17 = arith.constant 0.000000e+00 : f32
      %19 = vector.broadcast %cst_17 : f32 to vector<128x128xf32>
      %20 = arith.maximumf %18, %19 : vector<128x128xf32>
      %21 = arith.truncf %20 : vector<128x128xf32> to vector<128x128xbf16>
      %c0_18 = arith.constant 0 : index
      %c0_19 = arith.constant 0 : index
      %22 = vector.load %arg6[%c0_18, %c0_19] : memref<128x128xbf16, #tpu.memory_space<vmem>>, vector<128x128xbf16>
      %cst_20 = arith.constant dense<0.000000e+00> : vector<128x128xf32>
      %23 = tpu.matmul %21, %22, %cst_20 {dimension_numbers = #tpu.dot_dimension_numbers<[1], [0], [0], [1], [0, 0, 1, 1], [], []>} : vector<128x128xbf16>, vector<128x128xbf16>, vector<128x128xf32> -> vector<128x128xf32>
      %c0_21 = arith.constant 0 : index
      %c0_22 = arith.constant 0 : index
      %24 = vector.load %arg7[%c0_21, %c0_22] : memref<1x128xf32, #tpu.memory_space<vmem>>, vector<1x128xf32>
      %25 = vector.broadcast %24 : vector<1x128xf32> to vector<128x128xf32>
      %26 = arith.addf %23, %25 : vector<128x128xf32>
      %c0_23 = arith.constant 0 : index
      %c0_24 = arith.constant 0 : index
      %27 = vector.load %arg8[%c0_23, %c0_24] : memref<128x128xf32, #tpu.memory_space<vmem>>, vector<128x128xf32>
      tpu.vector_store %arg8[%c0_23, %c0_24], %26 {strides = array<i32>} : memref<128x128xf32, #tpu.memory_space<vmem>>, vector<128x128xf32>,
    } else {
    }
    return
  }
  func.func @transform_0(%arg0: i32, %arg1: i32) -> (i32, i32) {
    %c0_i32 = arith.constant 0 : i32
    return %arg0, %arg1 : i32, i32
  }
  func.func @transform_1(%arg0: i32, %arg1: i32) -> (i32, i32) {
    %c0_i32 = arith.constant 0 : i32
    %c0_i32_0 = arith.constant 0 : i32
    return %arg1, %c0_i32 : i32, i32
  }
  func.func @transform_2(%arg0: i32, %arg1: i32) -> (i32, i32) {
    %c0_i32 = arith.constant 0 : i32
    %c0_i32_0 = arith.constant 0 : i32
    %c0_i32_1 = arith.constant 0 : i32
    return %c0_i32, %c0_i32_0 : i32, i32
  }
  func.func @transform_3(%arg0: i32, %arg1: i32) -> (i32, i32) {
    %c0_i32 = arith.constant 0 : i32
    %c0_i32_0 = arith.constant 0 : i32
    %c0_i32_1 = arith.constant 0 : i32
    return %c0_i32, %c0_i32_0 : i32, i32
  }
  func.func @transform_4(%arg0: i32, %arg1: i32) -> (i32, i32) {
    %c0_i32 = arith.constant 0 : i32
    %c0_i32_0 = arith.constant 0 : i32
    %c0_i32_1 = arith.constant 0 : i32
    return %c0_i32, %c0_i32_0 : i32, i32
  }
  func.func @transform_5(%arg0: i32, %arg1: i32) -> (i32, i32) {
    %c0_i32 = arith.constant 0 : i32
    %c0_i32_0 = arith.constant 0 : i32
    %c0_i32_1 = arith.constant 0 : i32
    return %c0_i32, %c0_i32_0 : i32, i32
  }
  func.func @transform_6(%arg0: i32, %arg1: i32) -> (i32, i32) {
    %c0_i32 = arith.constant 0 : i32
    %c0_i32_0 = arith.constant 0 : i32
    return %arg0, %c0_i32 : i32, i32
  }
}

</mosaic_0001>

<llo_original>
// kernel: tpu_custom_call.1
$region0: #{tpu_custom_call.1}
  #allocation0 [shape = 'u32[]', space=smem, size = 0x4, offset = 0x4, fixed_abs, tag = 'smem constant byte address 0x4 - core index']
  #allocation1 [shape = 'u32[144,128]{1,0:T(1,128)}', space=vmem, size = 0x12000, scoped, tag = 'internal scratch']
  #allocation2 [shape = 'f32[128,128]{1,0:T(8,128)}', space=vmem, size = 0x10000, scoped, tag = 'scratch operand']
  %s0 = inlined_call_operand.hbm [shape: bf16[128,128], index: 0, kind: input, shape index: {}]
  %s1 = inlined_call_operand.hbm [shape: bf16[128,128], index: 1, kind: input, shape index: {}]
  %s2 = inlined_call_operand.hbm [shape: bf16[128,128], index: 2, kind: input, shape index: {}]
  %s3 = inlined_call_operand.vmem [shape: f32[1,128], index: 3, kind: input, shape index: {}]
  %s4 = inlined_call_operand.hbm [shape: bf16[128,128], index: 4, kind: input, shape index: {}]
  %s5 = inlined_call_operand.vmem [shape: f32[1,128], index: 5, kind: input, shape index: {}]
  %s6 = inlined_call_operand.hbm [shape: f32[128,128], index: 6, kind: output, shape index: {}]
  %s7 = sld [smem:[#allocation0]]
  $region58: #{tpu_custom_call.1} parent=0
    _
  %s9 = ssub.s32 1, %s7
  %s10 = scalar_select 0, %s9, %s7
  $region1: #{tpu_custom_call.1} parent=0
    #allocation3 [shape = 'u8[32768]{0}', space=vmem, size = 0x8000, scoped, tag = 'input window, operand 0, single buffered']
    #allocation4 [shape = 's32[1]{0}', space=sflag, size = 0x4, scoped, tag = 'scoped memory for tpu_custom_call.1']
    #allocation5 [shape = 's32[1]{0}', space=sflag, size = 0x4, scoped, tag = 'scoped memory for tpu_custom_call.1']
    #allocation6 [shape = 'u8[32768]{0}', space=vmem, size = 0x8000, scoped, tag = 'input window, operand 1, single buffered']
    #allocation7 [shape = 's32[1]{0}', space=sflag, size = 0x4, scoped, tag = 'scoped memory for tpu_custom_call.1']
    #allocation8 [shape = 'u8[32768]{0}', space=vmem, size = 0x8000, scoped, tag = 'input window, operand 2, single buffered']
    #allocation9 [shape = 'u8[32768]{0}', space=vmem, size = 0x8000, scoped, tag = 'input window, operand 4, single buffered']
    #allocation10 [shape = 's32[1]{0}', space=sflag, size = 0x4, scoped, tag = 'scoped memory for tpu_custom_call.1']
    #allocation11 [shape = 'u8[65536]{0}', space=vmem, size = 0x10000, scoped, tag = 'output window, operand 0, single buffered']
    %11 = vsyncpa [#allocation4], 0
    %12 = vsyncpa [#allocation7], 0
    %13 = vsyncpa [#allocation10], 0
    %14 = vsyncpa [#allocation5], 0
    // Predicated region
    $region2: #{tpu_custom_call.1} parent=1 // pred_check
      _
    $region3: #{tpu_custom_call.1} parent=1 // pred_check_branch
      %16 = sbr.rel (0) target = $region5
    $region4: #{tpu_custom_call.1} parent=1 // pred_region
      %s18 = ssub.s32 1024, 1024
      %19 = vsyncadd [#allocation4], %s18
      %s20 = sshll.u32 [#allocation3], 4
      %s21 = int_to_ptr.vmem [resolvable:$true] %s20
      %26 = dma.hbm_to_vmem [thread:$0]  %s0, 1024, %s21, [#allocation4], 64, 64, 4
    $region5: #{tpu_custom_call.1} parent=1 // pred_fallthru
      _
    // Predicated region
    $region6: #{tpu_custom_call.1} parent=1 // pred_check
      _
    $region7: #{tpu_custom_call.1} parent=1 // pred_check_branch
      %28 = sbr.rel (0) target = $region9
    $region8: #{tpu_custom_call.1} parent=1 // pred_region
      %s30 = ssub.s32 1024, 1024
      %31 = vsyncadd [#allocation7], %s30
      %s32 = sshll.u32 [#allocation6], 4
      %s33 = int_to_ptr.vmem [resolvable:$true] %s32
      %38 = dma.hbm_to_vmem [thread:$0]  %s1, 1024, %s33, [#allocation7], 64, 64, 4
    $region9: #{tpu_custom_call.1} parent=1 // pred_fallthru
      _
    // Predicated region
    $region10: #{tpu_custom_call.1} parent=1 // pred_check
      _
    $region11: #{tpu_custom_call.1} parent=1 // pred_check_branch
      %40 = sbr.rel (0) target = $region13
    $region12: #{tpu_custom_call.1} parent=1 // pred_region
      %s42 = ssub.s32 1024, 1024
      %43 = vsyncadd [#allocation7], %s42
      %s44 = sshll.u32 [#allocation8], 4
      %s45 = int_to_ptr.vmem [resolvable:$true] %s44
      %50 = dma.hbm_to_vmem [thread:$0]  %s2, 1024, %s45, [#allocation7], 64, 64, 4
    $region13: #{tpu_custom_call.1} parent=1 // pred_fallthru
      _
    // Predicated region
    $region14: #{tpu_custom_call.1} parent=1 // pred_check
      _
    $region15: #{tpu_custom_call.1} parent=1 // pred_check_branch
      %52 = sbr.rel (0) target = $region17
    $region16: #{tpu_custom_call.1} parent=1 // pred_region
      _
    $region17: #{tpu_custom_call.1} parent=1 // pred_fallthru
      _
    // Predicated region
    $region18: #{tpu_custom_call.1} parent=1 // pred_check
      _
    $region19: #{tpu_custom_call.1} parent=1 // pred_check_branch
      %54 = sbr.rel (0) target = $region21
    $region20: #{tpu_custom_call.1} parent=1 // pred_region
      %s56 = ssub.s32 1024, 1024
      %57 = vsyncadd [#allocation10], %s56
      %s58 = sshll.u32 [#allocation9], 4
      %s59 = int_to_ptr.vmem [resolvable:$true] %s58
      %64 = dma.hbm_to_vmem [thread:$0]  %s4, 1024, %s59, [#allocation10], 64, 64, 4
    $region21: #{tpu_custom_call.1} parent=1 // pred_fallthru
      _
    // Predicated region
    $region22: #{tpu_custom_call.1} parent=1 // pred_check
      _
    $region23: #{tpu_custom_call.1} parent=1 // pred_check_branch
      %66 = sbr.rel (0) target = $region25
    $region24: #{tpu_custom_call.1} parent=1 // pred_region
      _
    $region25: #{tpu_custom_call.1} parent=1 // pred_fallthru
      _
    // Predicated region
    $region26: #{tpu_custom_call.1} parent=1 // pred_check
      _
    $region27: #{tpu_custom_call.1} parent=1 // pred_check_branch
      %68 = sbr.rel (0) target = $region29
    $region28: #{tpu_custom_call.1} parent=1 // pred_region
      %69 = dma.done [#allocation4], 1024
    $region29: #{tpu_custom_call.1} parent=1 // pred_fallthru
      _
    // Predicated region
    $region30: #{tpu_custom_call.1} parent=1 // pred_check
      _
    $region31: #{tpu_custom_call.1} parent=1 // pred_check_branch
      %71 = sbr.rel (0) target = $region33
    $region32: #{tpu_custom_call.1} parent=1 // pred_region
      %72 = dma.done [#allocation7], 1024
    $region33: #{tpu_custom_call.1} parent=1 // pred_fallthru
      _
    // Predicated region
    $region34: #{tpu_custom_call.1} parent=1 // pred_check
      _
    $region35: #{tpu_custom_call.1} parent=1 // pred_check_branch
      %74 = sbr.rel (0) target = $region37
    $region36: #{tpu_custom_call.1} parent=1 // pred_region
      %75 = dma.done [#allocation7], 1024
    $region37: #{tpu_custom_call.1} parent=1 // pred_fallthru
      _
    // Predicated region
    $region38: #{tpu_custom_call.1} parent=1 // pred_check
      _
    $region39: #{tpu_custom_call.1} parent=1 // pred_check_branch
      %77 = sbr.rel (0) target = $region41
    $region40: #{tpu_custom_call.1} parent=1 // pred_region
      %78 = dma.done [#allocation10], 1024
    $region41: #{tpu_custom_call.1} parent=1 // pred_fallthru
      _
    %p80 = scmp.eq.s32.totalorder 0, 0
    // Predicated region
    $region42: #{tpu_custom_call.1} parent=1 // pred_check
      %p81 = pneg %p80
    $region43: #{tpu_custom_call.1} parent=1 // pred_check_branch
      %83 = sbr.rel (%p81) target = $region45
    $region44: #{tpu_custom_call.1} parent=1 // pred_region
      %84 = vst [vmem:[#allocation2] sm:$0xff] 0.0
      %85 = vst [vmem:[#allocation2 + $0x8] sm:$0xff] 0.0
      %86 = vst [vmem:[#allocation2 + $0x10] sm:$0xff] 0.0
      %87 = vst [vmem:[#allocation2 + $0x18] sm:$0xff] 0.0
      %88 = vst [vmem:[#allocation2 + $0x20] sm:$0xff] 0.0
      %89 = vst [vmem:[#allocation2 + $0x28] sm:$0xff] 0.0
      %90 = vst [vmem:[#allocation2 + $0x30] sm:$0xff] 0.0
      %91 = vst [vmem:[#allocation2 + $0x38] sm:$0xff] 0.0
      %92 = vst [vmem:[#allocation2 + $0x40] sm:$0xff] 0.0
      %93 = vst [vmem:[#allocation2 + $0x48] sm:$0xff] 0.0
      %94 = vst [vmem:[#allocation2 + $0x50] sm:$0xff] 0.0
      %95 = vst [vmem:[#allocation2 + $0x58] sm:$0xff] 0.0
      %96 = vst [vmem:[#allocation2 + $0x60] sm:$0xff] 0.0
      %97 = vst [vmem:[#allocation2 + $0x68] sm:$0xff] 0.0
      %98 = vst [vmem:[#allocation2 + $0x70] sm:$0xff] 0.0
      %99 = vst [vmem:[#allocation2 + $0x78] sm:$0xff] 0.0
    $region45: #{tpu_custom_call.1} parent=1 // pred_fallthru
      _
    %v100 = vld [vmem:[#allocation2] sm:$0xff]
    %v101 = vld [vmem:[#allocation2 + $0x8] sm:$0xff]
    %v102 = vld [vmem:[#allocation2 + $0x10] sm:$0xff]
    %v103 = vld [vmem:[#allocation2 + $0x18] sm:$0xff]
    %v104 = vld [vmem:[#allocation2 + $0x20] sm:$0xff]
    %v105 = vld [vmem:[#allocation2 + $0x28] sm:$0xff]
    %v106 = vld [vmem:[#allocation2 + $0x30] sm:$0xff]
    %v107 = vld [vmem:[#allocation2 + $0x38] sm:$0xff]
    %v108 = vld [vmem:[#allocation2 + $0x40] sm:$0xff]
    %v109 = vld [vmem:[#allocation2 + $0x48] sm:$0xff]
    %v110 = vld [vmem:[#allocation2 + $0x50] sm:$0xff]
    %v111 = vld [vmem:[#allocation2 + $0x58] sm:$0xff]
    %v112 = vld [vmem:[#allocation2 + $0x60] sm:$0xff]
    %v113 = vld [vmem:[#allocation2 + $0x68] sm:$0xff]
    %v114 = vld [vmem:[#allocation2 + $0x70] sm:$0xff]
    %v115 = vld [vmem:[#allocation2 + $0x78] sm:$0xff]
    %v116 = vld [vmem:[#allocation3] sm:$0xf]
    %v117 = vld [vmem:[#allocation3 + $0x4] sm:$0xf]
    %v118 = vld [vmem:[#allocation3 + $0x8] sm:$0xf]
    %v119 = vld [vmem:[#allocation3 + $0xc] sm:$0xf]
    %v120 = vld [vmem:[#allocation3 + $0x10] sm:$0xf]
    %v121 = vld [vmem:[#allocation3 + $0x14] sm:$0xf]
    %v122 = vld [vmem:[#allocation3 + $0x18] sm:$0xf]
    %v123 = vld [vmem:[#allocation3 + $0x1c] sm:$0xf]
    %v124 = vld [vmem:[#allocation3 + $0x20] sm:$0xf]
    %v125 = vld [vmem:[#allocation3 + $0x24] sm:$0xf]
    %v126 = vld [vmem:[#allocation3 + $0x28] sm:$0xf]
    %v127 = vld [vmem:[#allocation3 + $0x2c] sm:$0xf]
    %v128 = vld [vmem:[#allocation3 + $0x30] sm:$0xf]
    %v129 = vld [vmem:[#allocation3 + $0x34] sm:$0xf]
    %v130 = vld [vmem:[#allocation3 + $0x38] sm:$0xf]
    %v131 = vld [vmem:[#allocation3 + $0x3c] sm:$0xf]
    %v132 = vld [vmem:[#allocation6] sm:$0xf]
    %v133 = vld [vmem:[#allocation6 + $0x4] sm:$0xf]
    %v134 = vld [vmem:[#allocation6 + $0x8] sm:$0xf]
    %v135 = vld [vmem:[#allocation6 + $0xc] sm:$0xf]
    %v136 = vld [vmem:[#allocation6 + $0x10] sm:$0xf]
    %v137 = vld [vmem:[#allocation6 + $0x14] sm:$0xf]
    %v138 = vld [vmem:[#allocation6 + $0x18] sm:$0xf]
    %v139 = vld [vmem:[#allocation6 + $0x1c] sm:$0xf]
    %v140 = vld [vmem:[#allocation6 + $0x20] sm:$0xf]
    %v141 = vld [vmem:[#allocation6 + $0x24] sm:$0xf]
    %v142 = vld [vmem:[#allocation6 + $0x28] sm:$0xf]
    %v143 = vld [vmem:[#allocation6 + $0x2c] sm:$0xf]
    %v144 = vld [vmem:[#allocation6 + $0x30] sm:$0xf]
    %v145 = vld [vmem:[#allocation6 + $0x34] sm:$0xf]
    %v146 = vld [vmem:[#allocation6 + $0x38] sm:$0xf]
    %v147 = vld [vmem:[#allocation6 + $0x3c] sm:$0xf]
    %v164 = vunpack.c.l.b16 %v116
    %v165 = vunpack.c.l.b16 %v117
    %v166 = vunpack.c.l.b16 %v118
    %v167 = vunpack.c.l.b16 %v119
    %v168 = vunpack.c.l.b16 %v120
    %v169 = vunpack.c.l.b16 %v121
    %v170 = vunpack.c.l.b16 %v122
    %v171 = vunpack.c.l.b16 %v123
    %v172 = vunpack.c.l.b16 %v124
    %v173 = vunpack.c.l.b16 %v125
    %v174 = vunpack.c.l.b16 %v126
    %v175 = vunpack.c.l.b16 %v127
    %v176 = vunpack.c.l.b16 %v128
    %v177 = vunpack.c.l.b16 %v129
    %v178 = vunpack.c.l.b16 %v130
    %v179 = vunpack.c.l.b16 %v131
    %v180 = vpack.c.b16 %v165, %v164
    %v181 = vpack.c.b16 %v167, %v166
    %v182 = vpack.c.b16 %v169, %v168
    %v183 = vpack.c.b16 %v171, %v170
    %v184 = vpack.c.b16 %v173, %v172
    %v185 = vpack.c.b16 %v175, %v174
    %v186 = vpack.c.b16 %v177, %v176
    %v187 = vpack.c.b16 %v179, %v178
    %v212 = vunpack.c.l.b16 %v132
    %v213 = vunpack.c.l.b16 %v133
    %v214 = vunpack.c.l.b16 %v134
    %v215 = vunpack.c.l.b16 %v135
    %v216 = vunpack.c.l.b16 %v136
    %v217 = vunpack.c.l.b16 %v137
    %v218 = vunpack.c.l.b16 %v138
    %v219 = vunpack.c.l.b16 %v139
    %v220 = vunpack.c.l.b16 %v140
    %v221 = vunpack.c.l.b16 %v141
    %v222 = vunpack.c.l.b16 %v142
    %v223 = vunpack.c.l.b16 %v143
    %v224 = vunpack.c.l.b16 %v144
    %v225 = vunpack.c.l.b16 %v145
    %v226 = vunpack.c.l.b16 %v146
    %v227 = vunpack.c.l.b16 %v147
    %v228 = vpack.c.b16 %v213, %v212
    %v229 = vpack.c.b16 %v215, %v214
    %v230 = vpack.c.b16 %v217, %v216
    %v231 = vpack.c.b16 %v219, %v218
    %v232 = vpack.c.b16 %v221, %v220
    %v233 = vpack.c.b16 %v223, %v222
    %v234 = vpack.c.b16 %v225, %v224
    %v235 = vpack.c.b16 %v227, %v226
    %244 = vmatprep.subr.bf16.mxu0 0
    %245 = vmatpush1.bf16.msra.mxu0 %v235
    %246 = vmatprep.subr.bf16.mxu0 0
    %247 = vmatpush1.bf16.msra.mxu0 %v234
    %248 = vmatprep.subr.bf16.mxu0 0
    %249 = vmatpush1.bf16.msra.mxu0 %v233
    %250 = vmatprep.subr.bf16.mxu0 0
    %251 = vmatpush1.bf16.msra.mxu0 %v232
    %252 = vmatprep.subr.bf16.mxu0 0
    %253 = vmatpush1.bf16.msra.mxu0 %v231
    %254 = vmatprep.subr.bf16.mxu0 0
    %255 = vmatpush1.bf16.msra.mxu0 %v230
    %256 = vmatprep.subr.bf16.mxu0 0
    %257 = vmatpush1.bf16.msra.mxu0 %v229
    %258 = vmatprep.subr.bf16.mxu0 0
    %259 = vmatpush1.bf16.msra.mxu0 %v228
    %260 = vmatprep.subr.bf16.mxu0 0
    %261 = vmatpush2.bf16.msra.mxu0 0
    %262 = vmatprep.subr.bf16.mxu0 0
    %263 = vmatpush2.bf16.msra.mxu0 0
    %264 = vmatprep.subr.bf16.mxu0 0
    %265 = vmatpush2.bf16.msra.mxu0 0
    %266 = vmatprep.subr.bf16.mxu0 0
    %267 = vmatpush2.bf16.msra.mxu0 0
    %268 = vmatprep.subr.bf16.mxu0 0
    %269 = vmatpush2.bf16.msra.mxu0 0
    %270 = vmatprep.subr.bf16.mxu0 0
    %271 = vmatpush2.bf16.msra.mxu0 0
    %272 = vmatprep.subr.bf16.mxu0 0
    %273 = vmatpush2.bf16.msra.mxu0 0
    %274 = vmatprep.subr.bf16.mxu0 0
    %275 = vmatpush2.bf16.msra.mxu0 0
    %276 = vmatprep.mubr.bf16.mxu0 0
    %277 = vmatmul.mubr.bf16.gmra.mxu0 %v180
    %v278 = vpop.f32.mrf.mxu0
    %v279 = vadd.f32 0.0, %v278
    %v280 = vpop.f32.mrf.mxu0
    %v281 = vpop.f32.mrf.mxu0
    %v282 = vadd.f32 0.0, %v281
    %v283 = vpop.f32.mrf.mxu0
    %284 = vmatprep.mubr.bf16.mxu0 0
    %285 = vmatmul.mubr.bf16.gmra.mxu0 %v181
    %v286 = vpop.f32.mrf.mxu0
    %v287 = vadd.f32 0.0, %v286
    %v288 = vpop.f32.mrf.mxu0
    %v289 = vpop.f32.mrf.mxu0
    %v290 = vadd.f32 0.0, %v289
    %v291 = vpop.f32.mrf.mxu0
    %292 = vmatprep.mubr.bf16.mxu0 0
    %293 = vmatmul.mubr.bf16.gmra.mxu0 %v182
    %v294 = vpop.f32.mrf.mxu0
    %v295 = vadd.f32 0.0, %v294
    %v296 = vpop.f32.mrf.mxu0
    %v297 = vpop.f32.mrf.mxu0
    %v298 = vadd.f32 0.0, %v297
    %v299 = vpop.f32.mrf.mxu0
    %300 = vmatprep.mubr.bf16.mxu0 0
    %301 = vmatmul.mubr.bf16.gmra.mxu0 %v183
    %v302 = vpop.f32.mrf.mxu0
    %v303 = vadd.f32 0.0, %v302
    %v304 = vpop.f32.mrf.mxu0
    %v305 = vpop.f32.mrf.mxu0
    %v306 = vadd.f32 0.0, %v305
    %v307 = vpop.f32.mrf.mxu0
    %308 = vmatprep.mubr.bf16.mxu0 0
    %309 = vmatmul.mubr.bf16.gmra.mxu0 %v184
    %v310 = vpop.f32.mrf.mxu0
    %v311 = vadd.f32 0.0, %v310
    %v312 = vpop.f32.mrf.mxu0
    %v313 = vpop.f32.mrf.mxu0
    %v314 = vadd.f32 0.0, %v313
    %v315 = vpop.f32.mrf.mxu0
    %316 = vmatprep.mubr.bf16.mxu0 0
    %317 = vmatmul.mubr.bf16.gmra.mxu0 %v185
    %v318 = vpop.f32.mrf.mxu0
    %v319 = vadd.f32 0.0, %v318
    %v320 = vpop.f32.mrf.mxu0
    %v321 = vpop.f32.mrf.mxu0
    %v322 = vadd.f32 0.0, %v321
    %v323 = vpop.f32.mrf.mxu0
    %324 = vmatprep.mubr.bf16.mxu0 0
    %325 = vmatmul.mubr.bf16.gmra.mxu0 %v186
    %v326 = vpop.f32.mrf.mxu0
    %v327 = vadd.f32 0.0, %v326
    %v328 = vpop.f32.mrf.mxu0
    %v329 = vpop.f32.mrf.mxu0
    %v330 = vadd.f32 0.0, %v329
    %v331 = vpop.f32.mrf.mxu0
    %332 = vmatprep.mubr.bf16.mxu0 0
    %333 = vmatmul.mubr.bf16.gmra.mxu0 %v187
    %v334 = vpop.f32.mrf.mxu0
    %v335 = vadd.f32 0.0, %v334
    %v336 = vpop.f32.mrf.mxu0
    %v337 = vpop.f32.mrf.mxu0
    %v338 = vadd.f32 0.0, %v337
    %v339 = vpop.f32.mrf.mxu0
    %340 = vdwg.mxu0
    %v341 = vadd.f32 %v100, %v279
    %v342 = vadd.f32 %v101, %v282
    %v343 = vadd.f32 %v102, %v287
    %v344 = vadd.f32 %v103, %v290
    %v345 = vadd.f32 %v104, %v295
    %v346 = vadd.f32 %v105, %v298
    %v347 = vadd.f32 %v106, %v303
    %v348 = vadd.f32 %v107, %v306
    %v349 = vadd.f32 %v108, %v311
    %v350 = vadd.f32 %v109, %v314
    %v351 = vadd.f32 %v110, %v319
    %v352 = vadd.f32 %v111, %v322
    %v353 = vadd.f32 %v112, %v327
    %v354 = vadd.f32 %v113, %v330
    %v355 = vadd.f32 %v114, %v335
    %v356 = vadd.f32 %v115, %v338
    %357 = vst [vmem:[#allocation2] sm:$0xff] %v341
    %358 = vst [vmem:[#allocation2 + $0x8] sm:$0xff] %v342
    %359 = vst [vmem:[#allocation2 + $0x10] sm:$0xff] %v343
    %360 = vst [vmem:[#allocation2 + $0x18] sm:$0xff] %v344
    %361 = vst [vmem:[#allocation2 + $0x20] sm:$0xff] %v345
    %362 = vst [vmem:[#allocation2 + $0x28] sm:$0xff] %v346
    %363 = vst [vmem:[#allocation2 + $0x30] sm:$0xff] %v347
    %364 = vst [vmem:[#allocation2 + $0x38] sm:$0xff] %v348
    %365 = vst [vmem:[#allocation2 + $0x40] sm:$0xff] %v349
    %366 = vst [vmem:[#allocation2 + $0x48] sm:$0xff] %v350
    %367 = vst [vmem:[#allocation2 + $0x50] sm:$0xff] %v351
    %368 = vst [vmem:[#allocation2 + $0x58] sm:$0xff] %v352
    %369 = vst [vmem:[#allocation2 + $0x60] sm:$0xff] %v353
    %370 = vst [vmem:[#allocation2 + $0x68] sm:$0xff] %v354
    %371 = vst [vmem:[#allocation2 + $0x70] sm:$0xff] %v355
    %372 = vst [vmem:[#allocation2 + $0x78] sm:$0xff] %v356
    // Predicated region
    $region46: #{tpu_custom_call.1} parent=1 // pred_check
      %p373 = pneg %p80
    $region47: #{tpu_custom_call.1} parent=1 // pred_check_branch
      %375 = sbr.rel (%p373) target = $region49
    $region48: #{tpu_custom_call.1} parent=1 // pred_region
      %v376 = vld [vmem:[#allocation2] sm:$0xff]
      %v377 = vld [vmem:[#allocation2 + $0x8] sm:$0xff]
      %v378 = vld [vmem:[#allocation2 + $0x10] sm:$0xff]
      %v379 = vld [vmem:[#allocation2 + $0x18] sm:$0xff]
      %v380 = vld [vmem:[#allocation2 + $0x20] sm:$0xff]
      %v381 = vld [vmem:[#allocation2 + $0x28] sm:$0xff]
      %v382 = vld [vmem:[#allocation2 + $0x30] sm:$0xff]
      %v383 = vld [vmem:[#allocation2 + $0x38] sm:$0xff]
      %v384 = vld [vmem:[#allocation2 + $0x40] sm:$0xff]
      %v385 = vld [vmem:[#allocation2 + $0x48] sm:$0xff]
      %v386 = vld [vmem:[#allocation2 + $0x50] sm:$0xff]
      %v387 = vld [vmem:[#allocation2 + $0x58] sm:$0xff]
      %v388 = vld [vmem:[#allocation2 + $0x60] sm:$0xff]
      %v389 = vld [vmem:[#allocation2 + $0x68] sm:$0xff]
      %v390 = vld [vmem:[#allocation2 + $0x70] sm:$0xff]
      %v391 = vld [vmem:[#allocation2 + $0x78] sm:$0xff]
      %v392 = vpack.c.bf16 %v377, %v376
      %v393 = vpack.c.bf16 %v379, %v378
      %v394 = vpack.c.bf16 %v381, %v380
      %v395 = vpack.c.bf16 %v383, %v382
      %v396 = vpack.c.bf16 %v385, %v384
      %v397 = vpack.c.bf16 %v387, %v386
      %v398 = vpack.c.bf16 %v389, %v388
      %v399 = vpack.c.bf16 %v391, %v390
      %v400 = vld [vmem:[#allocation8] sm:$0xf]
      %v401 = vld [vmem:[#allocation8 + $0x4] sm:$0xf]
      %v402 = vld [vmem:[#allocation8 + $0x8] sm:$0xf]
      %v403 = vld [vmem:[#allocation8 + $0xc] sm:$0xf]
      %v404 = vld [vmem:[#allocation8 + $0x10] sm:$0xf]
      %v405 = vld [vmem:[#allocation8 + $0x14] sm:$0xf]
      %v406 = vld [vmem:[#allocation8 + $0x18] sm:$0xf]
      %v407 = vld [vmem:[#allocation8 + $0x1c] sm:$0xf]
      %v408 = vld [vmem:[#allocation8 + $0x20] sm:$0xf]
      %v409 = vld [vmem:[#allocation8 + $0x24] sm:$0xf]
      %v410 = vld [vmem:[#allocation8 + $0x28] sm:$0xf]
      %v411 = vld [vmem:[#allocation8 + $0x2c] sm:$0xf]
      %v412 = vld [vmem:[#allocation8 + $0x30] sm:$0xf]
      %v413 = vld [vmem:[#allocation8 + $0x34] sm:$0xf]
      %v414 = vld [vmem:[#allocation8 + $0x38] sm:$0xf]
      %v415 = vld [vmem:[#allocation8 + $0x3c] sm:$0xf]
      %v416 = vld [vmem:[%s3] sm:$0x1]
      %v418 = vlaneseq
      %v419 = vshrl.u32 %v418, 7
      %v420 = vsub.s32 0, %v419
      %v421 = vrot.slane %v416, %v420
      %v439 = vunpack.c.l.b16 %v400
      %v440 = vunpack.c.l.b16 %v401
      %v441 = vunpack.c.l.b16 %v402
      %v442 = vunpack.c.l.b16 %v403
      %v443 = vunpack.c.l.b16 %v404
      %v444 = vunpack.c.l.b16 %v405
      %v445 = vunpack.c.l.b16 %v406
      %v446 = vunpack.c.l.b16 %v407
      %v447 = vunpack.c.l.b16 %v408
      %v448 = vunpack.c.l.b16 %v409
      %v449 = vunpack.c.l.b16 %v410
      %v450 = vunpack.c.l.b16 %v411
      %v451 = vunpack.c.l.b16 %v412
      %v452 = vunpack.c.l.b16 %v413
      %v453 = vunpack.c.l.b16 %v414
      %v454 = vunpack.c.l.b16 %v415
      %v455 = vpack.c.b16 %v440, %v439
      %v456 = vpack.c.b16 %v442, %v441
      %v457 = vpack.c.b16 %v444, %v443
      %v458 = vpack.c.b16 %v446, %v445
      %v459 = vpack.c.b16 %v448, %v447
      %v460 = vpack.c.b16 %v450, %v449
      %v461 = vpack.c.b16 %v452, %v451
      %v462 = vpack.c.b16 %v454, %v453
      %471 = vmatprep.subr.bf16.mxu0 0
      %472 = vmatpush1.bf16.msra.mxu0 %v462
      %473 = vmatprep.subr.bf16.mxu0 0
      %474 = vmatpush1.bf16.msra.mxu0 %v461
      %475 = vmatprep.subr.bf16.mxu0 0
      %476 = vmatpush1.bf16.msra.mxu0 %v460
      %477 = vmatprep.subr.bf16.mxu0 0
      %478 = vmatpush1.bf16.msra.mxu0 %v459
      %479 = vmatprep.subr.bf16.mxu0 0
      %480 = vmatpush1.bf16.msra.mxu0 %v458
      %481 = vmatprep.subr.bf16.mxu0 0
      %482 = vmatpush1.bf16.msra.mxu0 %v457
      %483 = vmatprep.subr.bf16.mxu0 0
      %484 = vmatpush1.bf16.msra.mxu0 %v456
      %485 = vmatprep.subr.bf16.mxu0 0
      %486 = vmatpush1.bf16.msra.mxu0 %v455
      %487 = vmatprep.subr.bf16.mxu0 0
      %488 = vmatpush2.bf16.msra.mxu0 0
      %489 = vmatprep.subr.bf16.mxu0 0
      %490 = vmatpush2.bf16.msra.mxu0 0
      %491 = vmatprep.subr.bf16.mxu0 0
      %492 = vmatpush2.bf16.msra.mxu0 0
      %493 = vmatprep.subr.bf16.mxu0 0
      %494 = vmatpush2.bf16.msra.mxu0 0
      %495 = vmatprep.subr.bf16.mxu0 0
      %496 = vmatpush2.bf16.msra.mxu0 0
      %497 = vmatprep.subr.bf16.mxu0 0
      %498 = vmatpush2.bf16.msra.mxu0 0
      %499 = vmatprep.subr.bf16.mxu0 0
      %500 = vmatpush2.bf16.msra.mxu0 0
      %501 = vmatprep.subr.bf16.mxu0 0
      %502 = vmatpush2.bf16.msra.mxu0 0
      %503 = vmatprep.mubr.bf16.mxu0 0
      %504 = vmatmul.mubr.bf16.gmra.mxu0 %v392
      %v505 = vpop.f32.mrf.mxu0
      %v506 = vadd.f32 %v421, %v505
      %v507 = vpop.f32.mrf.mxu0
      %v508 = vpop.f32.mrf.mxu0
      %v509 = vadd.f32 %v421, %v508
      %v510 = vpop.f32.mrf.mxu0
      %511 = vmatprep.mubr.bf16.mxu0 0
      %512 = vmatmul.mubr.bf16.gmra.mxu0 %v393
      %v513 = vpop.f32.mrf.mxu0
      %v514 = vadd.f32 %v421, %v513
      %v515 = vpop.f32.mrf.mxu0
      %v516 = vpop.f32.mrf.mxu0
      %v517 = vadd.f32 %v421, %v516
      %v518 = vpop.f32.mrf.mxu0
      %519 = vmatprep.mubr.bf16.mxu0 0
      %520 = vmatmul.mubr.bf16.gmra.mxu0 %v394
      %v521 = vpop.f32.mrf.mxu0
      %v522 = vadd.f32 %v421, %v521
      %v523 = vpop.f32.mrf.mxu0
      %v524 = vpop.f32.mrf.mxu0
      %v525 = vadd.f32 %v421, %v524
      %v526 = vpop.f32.mrf.mxu0
      %527 = vmatprep.mubr.bf16.mxu0 0
      %528 = vmatmul.mubr.bf16.gmra.mxu0 %v395
      %v529 = vpop.f32.mrf.mxu0
      %v530 = vadd.f32 %v421, %v529
      %v531 = vpop.f32.mrf.mxu0
      %v532 = vpop.f32.mrf.mxu0
      %v533 = vadd.f32 %v421, %v532
      %v534 = vpop.f32.mrf.mxu0
      %535 = vmatprep.mubr.bf16.mxu0 0
      %536 = vmatmul.mubr.bf16.gmra.mxu0 %v396
      %v537 = vpop.f32.mrf.mxu0
      %v538 = vadd.f32 %v421, %v537
      %v539 = vpop.f32.mrf.mxu0
      %v540 = vpop.f32.mrf.mxu0
      %v541 = vadd.f32 %v421, %v540
      %v542 = vpop.f32.mrf.mxu0
      %543 = vmatprep.mubr.bf16.mxu0 0
      %544 = vmatmul.mubr.bf16.gmra.mxu0 %v397
      %v545 = vpop.f32.mrf.mxu0
      %v546 = vadd.f32 %v421, %v545
      %v547 = vpop.f32.mrf.mxu0
      %v548 = vpop.f32.mrf.mxu0
      %v549 = vadd.f32 %v421, %v548
      %v550 = vpop.f32.mrf.mxu0
      %551 = vmatprep.mubr.bf16.mxu0 0
      %552 = vmatmul.mubr.bf16.gmra.mxu0 %v398
      %v553 = vpop.f32.mrf.mxu0
      %v554 = vadd.f32 %v421, %v553
      %v555 = vpop.f32.mrf.mxu0
      %v556 = vpop.f32.mrf.mxu0
      %v557 = vadd.f32 %v421, %v556
      %v558 = vpop.f32.mrf.mxu0
      %559 = vmatprep.mubr.bf16.mxu0 0
      %560 = vmatmul.mubr.bf16.gmra.mxu0 %v399
      %v561 = vpop.f32.mrf.mxu0
      %v562 = vadd.f32 %v421, %v561
      %v563 = vpop.f32.mrf.mxu0
      %v564 = vpop.f32.mrf.mxu0
      %v565 = vadd.f32 %v421, %v564
      %v566 = vpop.f32.mrf.mxu0
      %567 = vdwg.mxu0
      %v568 = vmax.f32 %v506, 0.0
      %v569 = vmax.f32 %v509, 0.0
      %v570 = vmax.f32 %v514, 0.0
      %v571 = vmax.f32 %v517, 0.0
      %v572 = vmax.f32 %v522, 0.0
      %v573 = vmax.f32 %v525, 0.0
      %v574 = vmax.f32 %v530, 0.0
      %v575 = vmax.f32 %v533, 0.0
      %v576 = vmax.f32 %v538, 0.0
      %v577 = vmax.f32 %v541, 0.0
      %v578 = vmax.f32 %v546, 0.0
      %v579 = vmax.f32 %v549, 0.0
      %v580 = vmax.f32 %v554, 0.0
      %v581 = vmax.f32 %v557, 0.0
      %v582 = vmax.f32 %v562, 0.0
      %v583 = vmax.f32 %v565, 0.0
      %v584 = vpack.c.bf16 %v569, %v568
      %v585 = vpack.c.bf16 %v571, %v570
      %v586 = vpack.c.bf16 %v573, %v572
      %v587 = vpack.c.bf16 %v575, %v574
      %v588 = vpack.c.bf16 %v577, %v576
      %v589 = vpack.c.bf16 %v579, %v578
      %v590 = vpack.c.bf16 %v581, %v580
      %v591 = vpack.c.bf16 %v583, %v582
      %v592 = vld [vmem:[#allocation9] sm:$0xf]
      %v593 = vld [vmem:[#allocation9 + $0x4] sm:$0xf]
      %v594 = vld [vmem:[#allocation9 + $0x8] sm:$0xf]
      %v595 = vld [vmem:[#allocation9 + $0xc] sm:$0xf]
      %v596 = vld [vmem:[#allocation9 + $0x10] sm:$0xf]
      %v597 = vld [vmem:[#allocation9 + $0x14] sm:$0xf]
      %v598 = vld [vmem:[#allocation9 + $0x18] sm:$0xf]
      %v599 = vld [vmem:[#allocation9 + $0x1c] sm:$0xf]
      %v600 = vld [vmem:[#allocation9 + $0x20] sm:$0xf]
      %v601 = vld [vmem:[#allocation9 + $0x24] sm:$0xf]
      %v602 = vld [vmem:[#allocation9 + $0x28] sm:$0xf]
      %v603 = vld [vmem:[#allocation9 + $0x2c] sm:$0xf]
      %v604 = vld [vmem:[#allocation9 + $0x30] sm:$0xf]
      %v605 = vld [vmem:[#allocation9 + $0x34] sm:$0xf]
      %v606 = vld [vmem:[#allocation9 + $0x38] sm:$0xf]
      %v607 = vld [vmem:[#allocation9 + $0x3c] sm:$0xf]
      %v608 = vld [vmem:[%s5] sm:$0x1]
      %v610 = vlaneseq
      %v611 = vshrl.u32 %v610, 7
      %v612 = vsub.s32 0, %v611
      %v613 = vrot.slane %v608, %v612
      %v631 = vunpack.c.l.b16 %v592
      %v632 = vunpack.c.l.b16 %v593
      %v633 = vunpack.c.l.b16 %v594
      %v634 = vunpack.c.l.b16 %v595
      %v635 = vunpack.c.l.b16 %v596
      %v636 = vunpack.c.l.b16 %v597
      %v637 = vunpack.c.l.b16 %v598
      %v638 = vunpack.c.l.b16 %v599
      %v639 = vunpack.c.l.b16 %v600
      %v640 = vunpack.c.l.b16 %v601
      %v641 = vunpack.c.l.b16 %v602
      %v642 = vunpack.c.l.b16 %v603
      %v643 = vunpack.c.l.b16 %v604
      %v644 = vunpack.c.l.b16 %v605
      %v645 = vunpack.c.l.b16 %v606
      %v646 = vunpack.c.l.b16 %v607
      %v647 = vpack.c.b16 %v632, %v631
      %v648 = vpack.c.b16 %v634, %v633
      %v649 = vpack.c.b16 %v636, %v635
      %v650 = vpack.c.b16 %v638, %v637
      %v651 = vpack.c.b16 %v640, %v639
      %v652 = vpack.c.b16 %v642, %v641
      %v653 = vpack.c.b16 %v644, %v643
      %v654 = vpack.c.b16 %v646, %v645
      %663 = vmatprep.subr.bf16.mxu0 0
      %664 = vmatpush1.bf16.msra.mxu0 %v654
      %665 = vmatprep.subr.bf16.mxu0 0
      %666 = vmatpush1.bf16.msra.mxu0 %v653
      %667 = vmatprep.subr.bf16.mxu0 0
      %668 = vmatpush1.bf16.msra.mxu0 %v652
      %669 = vmatprep.subr.bf16.mxu0 0
      %670 = vmatpush1.bf16.msra.mxu0 %v651
      %671 = vmatprep.subr.bf16.mxu0 0
      %672 = vmatpush1.bf16.msra.mxu0 %v650
      %673 = vmatprep.subr.bf16.mxu0 0
      %674 = vmatpush1.bf16.msra.mxu0 %v649
      %675 = vmatprep.subr.bf16.mxu0 0
      %676 = vmatpush1.bf16.msra.mxu0 %v648
      %677 = vmatprep.subr.bf16.mxu0 0
      %678 = vmatpush1.bf16.msra.mxu0 %v647
      %679 = vmatprep.subr.bf16.mxu0 0
      %680 = vmatpush2.bf16.msra.mxu0 0
      %681 = vmatprep.subr.bf16.mxu0 0
      %682 = vmatpush2.bf16.msra.mxu0 0
      %683 = vmatprep.subr.bf16.mxu0 0
      %684 = vmatpush2.bf16.msra.mxu0 0
      %685 = vmatprep.subr.bf16.mxu0 0
      %686 = vmatpush2.bf16.msra.mxu0 0
      %687 = vmatprep.subr.bf16.mxu0 0
      %688 = vmatpush2.bf16.msra.mxu0 0
      %689 = vmatprep.subr.bf16.mxu0 0
      %690 = vmatpush2.bf16.msra.mxu0 0
      %691 = vmatprep.subr.bf16.mxu0 0
      %692 = vmatpush2.bf16.msra.mxu0 0
      %693 = vmatprep.subr.bf16.mxu0 0
      %694 = vmatpush2.bf16.msra.mxu0 0
      %695 = vmatprep.mubr.bf16.mxu0 0
      %696 = vmatmul.mubr.bf16.gmra.mxu0 %v584
      %v697 = vpop.f32.mrf.mxu0
      %v698 = vadd.f32 %v613, %v697
      %v699 = vpop.f32.mrf.mxu0
      %v700 = vpop.f32.mrf.mxu0
      %v701 = vadd.f32 %v613, %v700
      %v702 = vpop.f32.mrf.mxu0
      %703 = vmatprep.mubr.bf16.mxu0 0
      %704 = vmatmul.mubr.bf16.gmra.mxu0 %v585
      %v705 = vpop.f32.mrf.mxu0
      %v706 = vadd.f32 %v613, %v705
      %v707 = vpop.f32.mrf.mxu0
      %v708 = vpop.f32.mrf.mxu0
      %v709 = vadd.f32 %v613, %v708
      %v710 = vpop.f32.mrf.mxu0
      %711 = vmatprep.mubr.bf16.mxu0 0
      %712 = vmatmul.mubr.bf16.gmra.mxu0 %v586
      %v713 = vpop.f32.mrf.mxu0
      %v714 = vadd.f32 %v613, %v713
      %v715 = vpop.f32.mrf.mxu0
      %v716 = vpop.f32.mrf.mxu0
      %v717 = vadd.f32 %v613, %v716
      %v718 = vpop.f32.mrf.mxu0
      %719 = vmatprep.mubr.bf16.mxu0 0
      %720 = vmatmul.mubr.bf16.gmra.mxu0 %v587
      %v721 = vpop.f32.mrf.mxu0
      %v722 = vadd.f32 %v613, %v721
      %v723 = vpop.f32.mrf.mxu0
      %v724 = vpop.f32.mrf.mxu0
      %v725 = vadd.f32 %v613, %v724
      %v726 = vpop.f32.mrf.mxu0
      %727 = vmatprep.mubr.bf16.mxu0 0
      %728 = vmatmul.mubr.bf16.gmra.mxu0 %v588
      %v729 = vpop.f32.mrf.mxu0
      %v730 = vadd.f32 %v613, %v729
      %v731 = vpop.f32.mrf.mxu0
      %v732 = vpop.f32.mrf.mxu0
      %v733 = vadd.f32 %v613, %v732
      %v734 = vpop.f32.mrf.mxu0
      %735 = vmatprep.mubr.bf16.mxu0 0
      %736 = vmatmul.mubr.bf16.gmra.mxu0 %v589
      %v737 = vpop.f32.mrf.mxu0
      %v738 = vadd.f32 %v613, %v737
      %v739 = vpop.f32.mrf.mxu0
      %v740 = vpop.f32.mrf.mxu0
      %v741 = vadd.f32 %v613, %v740
      %v742 = vpop.f32.mrf.mxu0
      %743 = vmatprep.mubr.bf16.mxu0 0
      %744 = vmatmul.mubr.bf16.gmra.mxu0 %v590
      %v745 = vpop.f32.mrf.mxu0
      %v746 = vadd.f32 %v613, %v745
      %v747 = vpop.f32.mrf.mxu0
      %v748 = vpop.f32.mrf.mxu0
      %v749 = vadd.f32 %v613, %v748
      %v750 = vpop.f32.mrf.mxu0
      %751 = vmatprep.mubr.bf16.mxu0 0
      %752 = vmatmul.mubr.bf16.gmra.mxu0 %v591
      %v753 = vpop.f32.mrf.mxu0
      %v754 = vadd.f32 %v613, %v753
      %v755 = vpop.f32.mrf.mxu0
      %v756 = vpop.f32.mrf.mxu0
      %v757 = vadd.f32 %v613, %v756
      %v758 = vpop.f32.mrf.mxu0
      %759 = vdwg.mxu0
      %760 = vst [vmem:[#allocation11] sm:$0xff] %v698
      %761 = vst [vmem:[#allocation11 + $0x8] sm:$0xff] %v701
      %762 = vst [vmem:[#allocation11 + $0x10] sm:$0xff] %v706
      %763 = vst [vmem:[#allocation11 + $0x18] sm:$0xff] %v709
      %764 = vst [vmem:[#allocation11 + $0x20] sm:$0xff] %v714
      %765 = vst [vmem:[#allocation11 + $0x28] sm:$0xff] %v717
      %766 = vst [vmem:[#allocation11 + $0x30] sm:$0xff] %v722
      %767 = vst [vmem:[#allocation11 + $0x38] sm:$0xff] %v725
      %768 = vst [vmem:[#allocation11 + $0x40] sm:$0xff] %v730
      %769 = vst [vmem:[#allocation11 + $0x48] sm:$0xff] %v733
      %770 = vst [vmem:[#allocation11 + $0x50] sm:$0xff] %v738
      %771 = vst [vmem:[#allocation11 + $0x58] sm:$0xff] %v741
      %772 = vst [vmem:[#allocation11 + $0x60] sm:$0xff] %v746
      %773 = vst [vmem:[#allocation11 + $0x68] sm:$0xff] %v749
      %774 = vst [vmem:[#allocation11 + $0x70] sm:$0xff] %v754
      %775 = vst [vmem:[#allocation11 + $0x78] sm:$0xff] %v757
    $region49: #{tpu_custom_call.1} parent=1 // pred_fallthru
      _
    // Predicated region
    $region50: #{tpu_custom_call.1} parent=1 // pred_check
      _
    $region51: #{tpu_custom_call.1} parent=1 // pred_check_branch
      %777 = sbr.rel (0) target = $region53
    $region52: #{tpu_custom_call.1} parent=1 // pred_region
      %s779 = ssub.s32 2048, 2048
      %780 = vsyncadd [#allocation5], %s779
      %s781 = sshll.u32 [#allocation11], 4
      %s782 = int_to_ptr.vmem [resolvable:$true] %s781
      %787 = dma.vmem_to_hbm [thread:$0]  %s782, 2048, %s6, [#allocation5], 128, 128, 8
    $region53: #{tpu_custom_call.1} parent=1 // pred_fallthru
      _
    // Predicated region
    $region54: #{tpu_custom_call.1} parent=1 // pred_check
      _
    $region55: #{tpu_custom_call.1} parent=1 // pred_check_branch
      %789 = sbr.rel (0) target = $region57
    $region56: #{tpu_custom_call.1} parent=1 // pred_region
      %790 = dma.done [#allocation5], 2048
    $region57: #{tpu_custom_call.1} parent=1 // pred_fallthru
      _
    %791 = vsyncpa [#allocation4], 1
    %792 = vsyncpa [#allocation7], 1
    %793 = vsyncpa [#allocation10], 1
    %794 = vsyncpa [#allocation5], 1

</llo_original>
